<compile_context>
chip_gen: v6e
topology: v6e:2x2x1
jax: 0.10.0
libtpu: 0.0.40
codegen_flags: <defaults>
</compile_context>

<pallas_src>
import math
import functools

import jax
import jax.numpy as jnp
from jax import lax
from jax.experimental import pallas as pl
from jax.experimental.pallas import tpu as pltpu

MAX_REL_POS = 16
NUM_REL = 2 * MAX_REL_POS + 1


# ----------------------------------------------------------------------------
# Small helpers
# ----------------------------------------------------------------------------
def _vmem_limit_bytes():
    """3/4 of physical VMEM when queryable, else leave the compiler default."""
    try:
        return int(pltpu.get_tpu_info().vmem_capacity_bytes * 3 // 4)
    except Exception:
        return None


def _mosaic_params(dimension_semantics):
    return pltpu.CompilerParams(dimension_semantics=dimension_semantics,
                                vmem_limit_bytes=_vmem_limit_bytes())


def _pick_m_tile(M):
    # capped at 512: >=512 already hits the HBM roofline, and 1024-wide tiles
    # overflow v7x's 64 MiB VMEM for d_model ~ 1024.
    for c in (512, 256, 128):
        if M % c == 0:
            return c
    return M


def _pick_q_tile(Lq):
    for c in (128, 64, 32, 16, 8):
        if Lq % c == 0:
            return c
    return Lq


# ----------------------------------------------------------------------------
# Linear kernels
# ----------------------------------------------------------------------------
def _linear_kernel(x_ref, w_ref, b_ref, o_ref):
    acc = jnp.dot(x_ref[...], w_ref[...], preferred_element_type=jnp.float32)
    o_ref[...] = (acc + b_ref[...]).astype(o_ref.dtype)


def pallas_linear(x, w, b):
    """y = x @ w + b, tiled over M with auto-pipelining."""
    M, K = x.shape
    N = w.shape[1]
    tm = _pick_m_tile(M)
    return pl.pallas_call(
        _linear_kernel,
        out_shape=jax.ShapeDtypeStruct((M, N), x.dtype),
        grid=(M // tm,),
        in_specs=[
            pl.BlockSpec((tm, K), lambda i: (i, 0)),
            pl.BlockSpec((K, N), lambda i: (0, 0)),
            pl.BlockSpec((1, N), lambda i: (0, 0)),
        ],
        out_specs=pl.BlockSpec((tm, N), lambda i: (i, 0)),
        compiler_params=_mosaic_params(("parallel",)),
    )(x, w, b)


def _qkv_fused_kernel(x_ref, w_ref, b_ref, q_ref, k_ref, v_ref, *, d_model):
    # one wide (tm, K) @ (K, 3D) MXU dot: x is DMA'd / buffered once, the LHS
    # streams through the MXU once for all three projections.
    acc = jnp.dot(x_ref[...], w_ref[...], preferred_element_type=jnp.float32) + b_ref[...]
    q_ref[...] = acc[:, 0 * d_model:1 * d_model].astype(q_ref.dtype)
    k_ref[...] = acc[:, 1 * d_model:2 * d_model].astype(k_ref.dtype)
    v_ref[...] = acc[:, 2 * d_model:3 * d_model].astype(v_ref.dtype)


def pallas_qkv_fused(x, w_qkv, b_qkv, d_model):
    """Self-attention projections: shared x, concatenated [wq|wk|wv] weights."""
    M, K = x.shape
    tm = _pick_m_tile(M)
    o_spec = pl.BlockSpec((tm, d_model), lambda i: (i, 0))
    return pl.pallas_call(
        functools.partial(_qkv_fused_kernel, d_model=d_model),
        out_shape=(jax.ShapeDtypeStruct((M, d_model), x.dtype),) * 3,
        grid=(M // tm,),
        in_specs=[
            pl.BlockSpec((tm, K), lambda i: (i, 0)),
            pl.BlockSpec((K, 3 * d_model), lambda i: (0, 0)),
            pl.BlockSpec((1, 3 * d_model), lambda i: (0, 0)),
        ],
        out_specs=(o_spec, o_spec, o_spec),
        compiler_params=_mosaic_params(("parallel",)),
    )(x, w_qkv, b_qkv)


# ----------------------------------------------------------------------------
# Relative multi-head attention (+ fused output projection)
#   grid = (B, Lq // tq); all heads processed inside; one lane-dense store.
# ----------------------------------------------------------------------------
def _rel_attn_kernel(q_ref, k_ref, v_ref, rk_t_ref, rv_ref, wo_ref, bo_ref,
                     o_ref, x_scratch, *, n_heads, head_dim, inv_scale,
                     compute_dtype):
    tq = q_ref.shape[1]
    Lk = k_ref.shape[1]
    q0 = pl.program_id(1) * tq            # absolute query offset of this tile

    # fold 1/scale into q once: (tq, d_model) multiply instead of (tq, Lk)
    q = (q_ref[0] * inv_scale).astype(compute_dtype)   # (tq, d_model)
    k = k_ref[0].astype(compute_dtype)                 # (Lk, d_model)
    v = v_ref[0].astype(compute_dtype)                 # (Lk, d_model)
    rk_t = rk_t_ref[...].astype(compute_dtype)         # (head_dim, NUM_REL)
    rv = rv_ref[...].astype(compute_dtype)             # (NUM_REL, head_dim)

    # relative-offset one-hot masks, hoisted out of the head loop and shared by
    # the attn2 expansion and the a_bucket reduction of EVERY head.
    row = lax.broadcasted_iota(jnp.int32, (tq, Lk), 0) + q0
    col = lax.broadcasted_iota(jnp.int32, (tq, Lk), 1)
    idx = jnp.clip(col - row, -MAX_REL_POS, MAX_REL_POS) + MAX_REL_POS
    onehot = [idx == r for r in range(NUM_REL)]        # NUM_REL (tq, Lk) masks

    for h in range(n_heads):
        cols = slice(h * head_dim, (h + 1) * head_dim)
        qh = q[:, cols]
        kh = k[:, cols]
        vh = v[:, cols]

        # content logits on the MXU (NT matmul, no explicit transpose)
        attn1 = lax.dot_general(qh, kh, (((1,), (1,)), ((), ())),
                                preferred_element_type=jnp.float32)       # (tq, Lk)

        # relative logits factored through the 33-row table (MXU)
        p_rel = jnp.dot(qh, rk_t, preferred_element_type=jnp.float32)     # (tq, NUM_REL)

        # expand attn2[i,j] = p_rel[i, idx[i,j]] with the shared masks
        attn2 = jnp.zeros((tq, Lk), jnp.float32)
        for r in range(NUM_REL):
            attn2 = attn2 + jnp.where(onehot[r], p_rel[:, r:r + 1], 0.0)

        s = attn1 + attn2
        m = jnp.max(s, axis=-1, keepdims=True)
        e = jnp.exp(s - m)
        denom = jnp.sum(e, axis=-1, keepdims=True)
        inv_d = pl.reciprocal(denom, approx=True)       # EUP slot
        inv_d = inv_d * (2.0 - denom * inv_d)           # one Newton step (exact-ish)
        attn = e * inv_d                                # (tq, Lk)
        # TODO(synk): nn.Dropout(p=0.1) omitted (eval-mode identity; training
        # parity would need pltpu.prng_seed/prng_random_bits masking).

        # weight1 = attn @ V_h (MXU)
        w1 = jnp.dot(attn.astype(compute_dtype), vh,
                     preferred_element_type=jnp.float32)                  # (tq, head_dim)

        # bucket attn over the 33 relative offsets, then one tiny MXU matmul
        bucket_cols = [jnp.sum(jnp.where(onehot[r], attn, 0.0),
                               axis=-1, keepdims=True) for r in range(NUM_REL)]
        a_bucket = jnp.concatenate(bucket_cols, axis=-1)                  # (tq, NUM_REL)
        w2 = jnp.dot(a_bucket.astype(compute_dtype), rv,
                     preferred_element_type=jnp.float32)                  # (tq, head_dim)

        # write this head straight into the merged-layout scratch (no concat,
        # no all-heads-live registers)
        x_scratch[:, cols] = (w1 + w2).astype(x_scratch.dtype)

    # fused output projection: one lane-dense (tq, D) @ (D, D) MXU dot + bias
    xo = x_scratch[...].astype(compute_dtype)
    out = jnp.dot(xo, wo_ref[...].astype(compute_dtype),
                  preferred_element_type=jnp.float32) + bo_ref[...]
    o_ref[0] = out.astype(o_ref.dtype)


def pallas_relative_attention_proj(q, k, v, rel_k_table, rel_v_table, wo, bo,
                                   n_heads, scale, compute_dtype=jnp.float32):
    """q/k/v: (B, L, d_model).  Returns projected output (B, Lq, d_model)."""
    B, Lq, D = q.shape
    Lk = k.shape[1]
    head_dim = D // n_heads
    tq = _pick_q_tile(Lq)
    nq = Lq // tq
    rel_k_t = rel_k_table.T   # (head_dim, NUM_REL), tiny, transposed once in XLA

    kernel = functools.partial(
        _rel_attn_kernel, n_heads=n_heads, head_dim=head_dim,
        inv_scale=1.0 / scale, compute_dtype=compute_dtype)

    return pl.pallas_call(
        kernel,
        out_shape=jax.ShapeDtypeStruct((B, Lq, D), q.dtype),
        grid=(B, nq),
        in_specs=[
            pl.BlockSpec((1, tq, D), lambda b, qi: (b, qi, 0)),          # q tile
            pl.BlockSpec((1, Lk, D), lambda b, qi: (b, 0, 0)),           # K resident over qi
            pl.BlockSpec((1, Lk, D), lambda b, qi: (b, 0, 0)),           # V resident over qi
            pl.BlockSpec((head_dim, NUM_REL), lambda b, qi: (0, 0)),     # tiny, grid-invariant
            pl.BlockSpec((NUM_REL, head_dim), lambda b, qi: (0, 0)),     # tiny, grid-invariant
            pl.BlockSpec((D, D), lambda b, qi: (0, 0)),                  # wo resident
            pl.BlockSpec((1, D), lambda b, qi: (0, 0)),                  # bo resident
        ],
        out_specs=pl.BlockSpec((1, tq, D), lambda b, qi: (b, qi, 0)),
        scratch_shapes=[pltpu.VMEM((tq, D), jnp.float32)],
        compiler_params=_mosaic_params(("parallel", "parallel")),
    )(q, k, v, rel_k_t, rel_v_table, wo, bo)


# ----------------------------------------------------------------------------
# Parameter setup + glue (plain JAX)
# ----------------------------------------------------------------------------
def make_params(key, d_model, n_heads):
    head_dim = d_model // n_heads
    keys = jax.random.split(key, 10)
    lin_bound = 1.0 / math.sqrt(d_model)          # nn.Linear default-ish init
    xav = math.sqrt(6.0 / (NUM_REL + head_dim))   # xavier_uniform for (NUM_REL, head_dim)

    def lin(kw, kb):
        w = jax.random.uniform(kw, (d_model, d_model), jnp.float32, -lin_bound, lin_bound)
        b = jax.random.uniform(kb, (1, d_model), jnp.float32, -lin_bound, lin_bound)
        return w, b

    wq, bq = lin(keys[0], keys[1])
    wk, bk = lin(keys[2], keys[3])
    wv, bv = lin(keys[4], keys[5])
    wo, bo = lin(keys[6], keys[7])
    rel_k_table = jax.random.uniform(keys[8], (NUM_REL, head_dim), jnp.float32, -xav, xav)
    rel_v_table = jax.random.uniform(keys[9], (NUM_REL, head_dim), jnp.float32, -xav, xav)
    return dict(wq=wq, bq=bq, wk=wk, bk=bk, wv=wv, bv=bv, wo=wo, bo=bo,
                rel_k_table=rel_k_table, rel_v_table=rel_v_table)


def relative_mha_forward(params, query, key, value, n_heads,
                         compute_dtype=jnp.float32):
    B, Lq, d_model = query.shape
    scale = math.sqrt(B)  # module quirk: sqrt(batch_size), not sqrt(head_dim)

    xq = query.reshape(-1, d_model)

    # 1) input projections
    if (query is key) and (query is value):
        # self-attention: dedupe the shared activation, one wide MXU dot
        w_qkv = jnp.concatenate([params["wq"], params["wk"], params["wv"]], axis=1)
        b_qkv = jnp.concatenate([params["bq"], params["bk"], params["bv"]], axis=1)
        q2, k2, v2 = pallas_qkv_fused(xq, w_qkv, b_qkv, d_model)
    else:
        q2 = pallas_linear(xq, params["wq"], params["bq"])
        k2 = pallas_linear(key.reshape(-1, d_model), params["wk"], params["bk"])
        v2 = pallas_linear(value.reshape(-1, d_model), params["wv"], params["bv"])

    q = q2.reshape(B, -1, d_model)
    k = k2.reshape(B, -1, d_model)
    v = v2.reshape(B, -1, d_model)

    # 2) attention with the output projection fused into the epilogue
    out = pallas_relative_attention_proj(
        q, k, v, params["rel_k_table"], params["rel_v_table"],
        params["wo"], params["bo"], n_heads, scale, compute_dtype=compute_dtype)

    # 3) (B, Lq, d_model) -> (B*Lq, d_model) is a free reshape
    return out.reshape(-1, d_model)


# ----------------------------------------------------------------------------
# Pure-JAX reference (mirrors the PyTorch forward) for correctness checks
# ----------------------------------------------------------------------------
def relative_position_embeddings(table, length_q, length_k):
    rq = jnp.arange(length_q)
    rk = jnp.arange(length_k)
    dist = rk[None, :] - rq[:, None]
    idx = jnp.clip(dist, -MAX_REL_POS, MAX_REL_POS) + MAX_REL_POS
    return table[idx]  # (Lq, Lk, head_dim)


def reference_forward(params, query, key, value, n_heads):
    B, L, d_model = query.shape
    head_dim = d_model // n_heads
    scale = math.sqrt(B)
    q = query.reshape(-1, d_model) @ params["wq"] + params["bq"]
    k = key.reshape(-1, d_model) @ params["wk"] + params["bk"]
    v = value.reshape(-1, d_model) @ params["wv"] + params["bv"]
    q = q.reshape(B, -1, d_model); k = k.reshape(B, -1, d_model); v = v.reshape(B, -1, d_model)
    len_q, len_k, len_v = q.shape[1], k.shape[1], v.shape[1]
    qh = q.reshape(B, len_q, n_heads, head_dim).transpose(0, 2, 1, 3)
    kh = k.reshape(B, len_k, n_heads, head_dim).transpose(0, 2, 1, 3)
    vh = v.reshape(B, len_v, n_heads, head_dim).transpose(0, 2, 1, 3)
    attn1 = jnp.einsum("bhqd,bhkd->bhqk", qh, kh)
    rel_k = relative_position_embeddings(params["rel_k_table"], len_q, len_k)
    attn2 = jnp.einsum("bhqd,qkd->bhqk", qh, rel_k)
    attn = jax.nn.softmax((attn1 + attn2) / scale, axis=-1)
    w1 = jnp.einsum("bhqk,bhkd->bhqd", attn, vh)
    rel_v = relative_position_embeddings(params["rel_v_table"], len_q, len_v)
    w2 = jnp.einsum("bhqk,qkd->bhqd", attn, rel_v)
    x = (w1 + w2).transpose(0, 2, 1, 3).reshape(B * len_q, d_model)
    return x @ params["wo"] + params["bo"]


if __name__ == "__main__":
    D_MODEL, N_HEADS = 32, 4

    root = jax.random.PRNGKey(0)
    kp, kq, kk, kv, kx = jax.random.split(root, 5)
    params = make_params(kp, D_MODEL, N_HEADS)

    # --- test 1: cross-attention (distinct q/k/v), general projection path ---
    B1, L1 = 2, 16
    query = jax.random.normal(kq, (B1, L1, D_MODEL), jnp.float32)
    key = jax.random.normal(kk, (B1, L1, D_MODEL), jnp.float32)
    value = jax.random.normal(kv, (B1, L1, D_MODEL), jnp.float32)
    out1 = jax.block_until_ready(relative_mha_forward(params, query, key, value, N_HEADS))
    ref1 = reference_forward(params, query, key, value, N_HEADS)
    assert out1.shape == (B1 * L1, D_MODEL), out1.shape
    err1 = float(jnp.abs(out1 - ref1).max())
    assert jnp.allclose(out1, ref1, atol=2e-3, rtol=2e-3), err1

    # --- test 2: self-attention (fused QKV dedupe), multiple q tiles (tq=128),
    #     relative-position clipping exercised ---
    B2, L2 = 2, 256
    x = jax.random.normal(kx, (B2, L2, D_MODEL), jnp.float32)
    out2 = jax.block_until_ready(relative_mha_forward(params, x, x, x, N_HEADS))
    ref2 = reference_forward(params, x, x, x, N_HEADS)
    assert out2.shape == (B2 * L2, D_MODEL), out2.shape
    err2 = float(jnp.abs(out2 - ref2).max())
    assert jnp.allclose(out2, ref2, atol=2e-3, rtol=2e-3), err2

    print("KERNEL_OK")
</pallas_src>

<mosaic_0001>
module attributes {stable_mosaic.version = 11 : i64} {
  func.func @_linear_kernel(%arg0: i32, %arg1: memref<32x32xf32, #tpu.memory_space<vmem>>, %arg2: memref<32x32xf32, #tpu.memory_space<vmem>>, %arg3: memref<1x32xf32, #tpu.memory_space<vmem>>, %arg4: memref<32x32xf32, #tpu.memory_space<vmem>>) attributes {dimension_semantics = [#tpu.dimension_semantics<parallel>], iteration_bounds = array<i64: 1>, scalar_prefetch = 0 : i64, scratch_operands = 0 : i64, tpu.core_type = #tpu.core_type<tc>, window_params = [{transform_indices = @transform_0, window_bounds = array<i64: 32, 32>}, {pipeline_mode = #tpu.pipeline_mode<synchronous>, transform_indices = @transform_1, window_bounds = array<i64: 32, 32>}, {pipeline_mode = #tpu.pipeline_mode<synchronous>, transform_indices = @transform_2, window_bounds = array<i64: 1, 32>}, {transform_indices = @transform_3, window_bounds = array<i64: 32, 32>}]} {
    %c0 = arith.constant 0 : index
    %c0_0 = arith.constant 0 : index
    %0 = vector.load %arg1[%c0, %c0_0] : memref<32x32xf32, #tpu.memory_space<vmem>>, vector<32x32xf32>
    %c0_1 = arith.constant 0 : index
    %c0_2 = arith.constant 0 : index
    %1 = vector.load %arg2[%c0_1, %c0_2] : memref<32x32xf32, #tpu.memory_space<vmem>>, vector<32x32xf32>
    %cst = arith.constant dense<0.000000e+00> : vector<32x32xf32>
    %2 = tpu.matmul %0, %1, %cst {dimension_numbers = #tpu.dot_dimension_numbers<[1], [0], [0], [1], [0, 0, 1, 1], [], []>} : vector<32x32xf32>, vector<32x32xf32>, vector<32x32xf32> -> vector<32x32xf32>
    %c0_3 = arith.constant 0 : index
    %c0_4 = arith.constant 0 : index
    %3 = vector.load %arg3[%c0_3, %c0_4] : memref<1x32xf32, #tpu.memory_space<vmem>>, vector<1x32xf32>
    %4 = vector.broadcast %3 : vector<1x32xf32> to vector<32x32xf32>
    %5 = arith.addf %2, %4 : vector<32x32xf32>
    %c0_5 = arith.constant 0 : index
    %c0_6 = arith.constant 0 : index
    %6 = vector.load %arg4[%c0_5, %c0_6] : memref<32x32xf32, #tpu.memory_space<vmem>>, vector<32x32xf32>
    tpu.vector_store %arg4[%c0_5, %c0_6], %5 {strides = array<i32>} : memref<32x32xf32, #tpu.memory_space<vmem>>, vector<32x32xf32>,
    return
  }
  func.func @transform_0(%arg0: i32) -> (i32, i32) {
    %c0_i32 = arith.constant 0 : i32
    %c0_i32_0 = arith.constant 0 : i32
    return %arg0, %c0_i32 : i32, i32
  }
  func.func @transform_1(%arg0: i32) -> (i32, i32) {
    %c0_i32 = arith.constant 0 : i32
    %c0_i32_0 = arith.constant 0 : i32
    %c0_i32_1 = arith.constant 0 : i32
    return %c0_i32, %c0_i32_0 : i32, i32
  }
  func.func @transform_2(%arg0: i32) -> (i32, i32) {
    %c0_i32 = arith.constant 0 : i32
    %c0_i32_0 = arith.constant 0 : i32
    %c0_i32_1 = arith.constant 0 : i32
    return %c0_i32, %c0_i32_0 : i32, i32
  }
  func.func @transform_3(%arg0: i32) -> (i32, i32) {
    %c0_i32 = arith.constant 0 : i32
    %c0_i32_0 = arith.constant 0 : i32
    return %arg0, %c0_i32 : i32, i32
  }
}

</mosaic_0001>

<llo_original>
// kernel: tpu_custom_call.1
$region0: #{tpu_custom_call.1}
  #allocation0 [shape = 'u32[]', space=smem, size = 0x4, offset = 0x4, fixed_abs, tag = 'smem constant byte address 0x4 - core index']
  #allocation1 [shape = 'u32[144,128]{1,0:T(1,128)}', space=vmem, size = 0x12000, scoped, tag = 'internal scratch']
  %s0 = inlined_call_operand.hbm [shape: f32[32,32], index: 0, kind: input, shape index: {}]
  %s1 = inlined_call_operand.hbm [shape: f32[32,32], index: 1, kind: input, shape index: {}]
  %s2 = inlined_call_operand.vmem [shape: f32[1,32], index: 2, kind: input, shape index: {}]
  %s3 = inlined_call_operand.hbm [shape: f32[32,32], index: 3, kind: output, shape index: {}]
  %s4 = sld [smem:[#allocation0]]
  $region30: #{tpu_custom_call.1} parent=0
    _
  %s6 = ssub.s32 1, %s4
  %s7 = scalar_select 0, %s6, %s4
  $region1: #{tpu_custom_call.1} parent=0
    #allocation2 [shape = 'u8[16384]{0}', space=vmem, size = 0x4000, scoped, tag = 'input window, operand 0, single buffered']
    #allocation3 [shape = 's32[1]{0}', space=sflag, size = 0x4, scoped, tag = 'scoped memory for tpu_custom_call.1']
    #allocation4 [shape = 's32[1]{0}', space=sflag, size = 0x4, scoped, tag = 'scoped memory for tpu_custom_call.1']
    #allocation5 [shape = 'u8[16384]{0}', space=vmem, size = 0x4000, scoped, tag = 'input window, operand 1, single buffered']
    #allocation6 [shape = 's32[1]{0}', space=sflag, size = 0x4, scoped, tag = 'scoped memory for tpu_custom_call.1']
    #allocation7 [shape = 'u8[16384]{0}', space=vmem, size = 0x4000, scoped, tag = 'output window, operand 0, single buffered']
    %8 = vsyncpa [#allocation3], 0
    %9 = vsyncpa [#allocation6], 0
    %10 = vsyncpa [#allocation4], 0
    // Predicated region
    $region2: #{tpu_custom_call.1} parent=1 // pred_check
      _
    $region3: #{tpu_custom_call.1} parent=1 // pred_check_branch
      %12 = sbr.rel (0) target = $region5
    $region4: #{tpu_custom_call.1} parent=1 // pred_region
      %s14 = ssub.s32 512, 512
      %15 = vsyncadd [#allocation3], %s14
      %s16 = sshll.u32 [#allocation2], 4
      %s17 = int_to_ptr.vmem [resolvable:$true] %s16
      %22 = dma.hbm_to_vmem [thread:$0]  %s0, 512, %s17, [#allocation3], 128, 128, 8
    $region5: #{tpu_custom_call.1} parent=1 // pred_fallthru
      _
    // Predicated region
    $region6: #{tpu_custom_call.1} parent=1 // pred_check
      _
    $region7: #{tpu_custom_call.1} parent=1 // pred_check_branch
      %24 = sbr.rel (0) target = $region9
    $region8: #{tpu_custom_call.1} parent=1 // pred_region
      %s26 = ssub.s32 512, 512
      %27 = vsyncadd [#allocation6], %s26
      %s28 = sshll.u32 [#allocation5], 4
      %s29 = int_to_ptr.vmem [resolvable:$true] %s28
      %34 = dma.hbm_to_vmem [thread:$0]  %s1, 512, %s29, [#allocation6], 128, 128, 8
    $region9: #{tpu_custom_call.1} parent=1 // pred_fallthru
      _
    // Predicated region
    $region10: #{tpu_custom_call.1} parent=1 // pred_check
      _
    $region11: #{tpu_custom_call.1} parent=1 // pred_check_branch
      %36 = sbr.rel (0) target = $region13
    $region12: #{tpu_custom_call.1} parent=1 // pred_region
      _
    $region13: #{tpu_custom_call.1} parent=1 // pred_fallthru
      _
    // Predicated region
    $region14: #{tpu_custom_call.1} parent=1 // pred_check
      _
    $region15: #{tpu_custom_call.1} parent=1 // pred_check_branch
      %38 = sbr.rel (0) target = $region17
    $region16: #{tpu_custom_call.1} parent=1 // pred_region
      %39 = dma.done [#allocation3], 512
    $region17: #{tpu_custom_call.1} parent=1 // pred_fallthru
      _
    // Predicated region
    $region18: #{tpu_custom_call.1} parent=1 // pred_check
      _
    $region19: #{tpu_custom_call.1} parent=1 // pred_check_branch
      %41 = sbr.rel (0) target = $region21
    $region20: #{tpu_custom_call.1} parent=1 // pred_region
      %42 = dma.done [#allocation6], 512
    $region21: #{tpu_custom_call.1} parent=1 // pred_fallthru
      _
    %v43 = vld [vmem:[#allocation2] sm:$0xff]
    %v44 = vld [vmem:[#allocation2 + $0x8] sm:$0xff]
    %v45 = vld [vmem:[#allocation2 + $0x10] sm:$0xff]
    %v46 = vld [vmem:[#allocation2 + $0x18] sm:$0xff]
    %v47 = vld [vmem:[#allocation5] sm:$0xff]
    %v48 = vld [vmem:[#allocation5 + $0x8] sm:$0xff]
    %v49 = vld [vmem:[#allocation5 + $0x10] sm:$0xff]
    %v50 = vld [vmem:[#allocation5 + $0x18] sm:$0xff]
    %v51 = vld [vmem:[%s2] sm:$0x1]
    %v53 = vlaneseq
    %v54 = vshrl.u32 %v53, 7
    %v55 = vsub.s32 0, %v54
    %v56 = vrot.slane %v51, %v55
    %vm58 = vcmask 261120
    %v60 = vsel %vm58, %v43, 0
    %v63 = vsel %vm58, %v44, 0
    %v66 = vsel %vm58, %v45, 0
    %v69 = vsel %vm58, %v46, 0
    %71 = vmatprep.subr.mxu0 0.0
    %72 = vmatpush1.msra.mxu0 0.0
    %73 = vmatprep.subr.mxu0 0.0
    %74 = vmatpush1.msra.mxu0 0.0
    %75 = vmatprep.subr.mxu0 0.0
    %76 = vmatpush1.msra.mxu0 0.0
    %77 = vmatprep.subr.mxu0 0.0
    %78 = vmatpush1.msra.mxu0 0.0
    %79 = vmatprep.subr.mxu0 0.0
    %80 = vmatpush1.msra.mxu0 0.0
    %81 = vmatprep.subr.mxu0 0.0
    %82 = vmatpush1.msra.mxu0 0.0
    %83 = vmatprep.subr.mxu0 0.0
    %84 = vmatpush1.msra.mxu0 0.0
    %85 = vmatprep.subr.mxu0 0.0
    %86 = vmatpush1.msra.mxu0 0.0
    %87 = vmatprep.subr.mxu0 0.0
    %88 = vmatpush1.msra.mxu0 0.0
    %89 = vmatprep.subr.mxu0 0.0
    %90 = vmatpush1.msra.mxu0 0.0
    %91 = vmatprep.subr.mxu0 0.0
    %92 = vmatpush1.msra.mxu0 0.0
    %93 = vmatprep.subr.mxu0 0.0
    %94 = vmatpush1.msra.mxu0 0.0
    %95 = vmatprep.subr.mxu0 0.0
    %96 = vmatpush1.msra.mxu0 %v50
    %97 = vmatprep.subr.mxu0 0.0
    %98 = vmatpush1.msra.mxu0 %v49
    %99 = vmatprep.subr.mxu0 0.0
    %100 = vmatpush1.msra.mxu0 %v48
    %101 = vmatprep.subr.mxu0 0.0
    %102 = vmatpush1.msra.mxu0 %v47
    %103 = vmatprep.subr.mxu0 0.0
    %104 = vmatpush2.msra.mxu0 0.0
    %105 = vmatprep.subr.mxu0 0.0
    %106 = vmatpush2.msra.mxu0 0.0
    %107 = vmatprep.subr.mxu0 0.0
    %108 = vmatpush2.msra.mxu0 0.0
    %109 = vmatprep.subr.mxu0 0.0
    %110 = vmatpush2.msra.mxu0 0.0
    %111 = vmatprep.subr.mxu0 0.0
    %112 = vmatpush2.msra.mxu0 0.0
    %113 = vmatprep.subr.mxu0 0.0
    %114 = vmatpush2.msra.mxu0 0.0
    %115 = vmatprep.subr.mxu0 0.0
    %116 = vmatpush2.msra.mxu0 0.0
    %117 = vmatprep.subr.mxu0 0.0
    %118 = vmatpush2.msra.mxu0 0.0
    %119 = vmatprep.subr.mxu0 0.0
    %120 = vmatpush2.msra.mxu0 0.0
    %121 = vmatprep.subr.mxu0 0.0
    %122 = vmatpush2.msra.mxu0 0.0
    %123 = vmatprep.subr.mxu0 0.0
    %124 = vmatpush2.msra.mxu0 0.0
    %125 = vmatprep.subr.mxu0 0.0
    %126 = vmatpush2.msra.mxu0 0.0
    %127 = vmatprep.subr.mxu0 0.0
    %128 = vmatpush2.msra.mxu0 0.0
    %129 = vmatprep.subr.mxu0 0.0
    %130 = vmatpush2.msra.mxu0 0.0
    %131 = vmatprep.subr.mxu0 0.0
    %132 = vmatpush2.msra.mxu0 0.0
    %133 = vmatprep.subr.mxu0 0.0
    %134 = vmatpush2.msra.mxu0 0.0
    %135 = vmatprep.mubr.f32.mxu0 0.0
    %136 = vmatmul.mubr.f32.gmra.mxu0 %v60
    %v137 = vpop.f32.mrf.mxu0
    %v138 = vadd.f32 %v56, %v137
    %v139 = vpop.f32.mrf.mxu0
    %140 = vmatprep.mubr.f32.mxu0 0.0
    %141 = vmatmul.mubr.f32.gmra.mxu0 %v63
    %v142 = vpop.f32.mrf.mxu0
    %v143 = vadd.f32 %v56, %v142
    %v144 = vpop.f32.mrf.mxu0
    %145 = vmatprep.mubr.f32.mxu0 0.0
    %146 = vmatmul.mubr.f32.gmra.mxu0 %v66
    %v147 = vpop.f32.mrf.mxu0
    %v148 = vadd.f32 %v56, %v147
    %v149 = vpop.f32.mrf.mxu0
    %150 = vmatprep.mubr.f32.mxu0 0.0
    %151 = vmatmul.mubr.f32.gmra.mxu0 %v69
    %v152 = vpop.f32.mrf.mxu0
    %v153 = vadd.f32 %v56, %v152
    %v154 = vpop.f32.mrf.mxu0
    %155 = vdwg.mxu0
    %156 = vst.msk [vmem:[#allocation7] sm:$0xff] %vm58, %v138
    %157 = vst.msk [vmem:[#allocation7 + $0x8] sm:$0xff] %vm58, %v143
    %158 = vst.msk [vmem:[#allocation7 + $0x10] sm:$0xff] %vm58, %v148
    %159 = vst.msk [vmem:[#allocation7 + $0x18] sm:$0xff] %vm58, %v153
    // Predicated region
    $region22: #{tpu_custom_call.1} parent=1 // pred_check
      _
    $region23: #{tpu_custom_call.1} parent=1 // pred_check_branch
      %161 = sbr.rel (0) target = $region25
    $region24: #{tpu_custom_call.1} parent=1 // pred_region
      %s163 = ssub.s32 512, 512
      %164 = vsyncadd [#allocation4], %s163
      %s165 = sshll.u32 [#allocation7], 4
      %s166 = int_to_ptr.vmem [resolvable:$true] %s165
      %171 = dma.vmem_to_hbm [thread:$0]  %s166, 512, %s3, [#allocation4], 128, 128, 8
    $region25: #{tpu_custom_call.1} parent=1 // pred_fallthru
      _
    // Predicated region
    $region26: #{tpu_custom_call.1} parent=1 // pred_check
      _
    $region27: #{tpu_custom_call.1} parent=1 // pred_check_branch
      %173 = sbr.rel (0) target = $region29
    $region28: #{tpu_custom_call.1} parent=1 // pred_region
      %174 = dma.done [#allocation4], 512
    $region29: #{tpu_custom_call.1} parent=1 // pred_fallthru
      _
    %175 = vsyncpa [#allocation3], 1
    %176 = vsyncpa [#allocation6], 1
    %177 = vsyncpa [#allocation4], 1

</llo_original>
